<compile_context>
chip_gen: v7x
topology: tpu7x:2x2x1
jax: 0.10.0
libtpu: 0.0.40
codegen_flags: <defaults>
</compile_context>

<pallas_src>
import functools

import jax
import jax.numpy as jnp
from jax import lax
from jax.experimental import pallas as pl
from jax.experimental.pallas import tpu as pltpu


def _round_up(x, m):
    return (x + m - 1) // m * m


def _cdiv(a, b):
    return -(-a // b)


def _choose_m_tile(m, *, cap=32768):
    """Lane-dense M tile: as large as the cap allows, but with an even (>=2) number of grid
    steps whenever M > 128 so v7x's two TensorCores both get work. At cap=32768 the
    double-buffered per-step VMEM footprint is ~8 MiB (fits v5e/v6e/v7x)."""
    m128 = _round_up(m, 128)
    if m128 <= 128:
        return 128
    n_tiles = max(2, _cdiv(m128, cap))
    n_tiles += n_tiles % 2          # even step count -> balanced megacore split on v7x
    return _round_up(_cdiv(m128, n_tiles), 128)


def _conv_gemm_kernel(w_ref, p_ref, o_ref):
    # w_ref: (Cout_pad, K_pad)  bf16 flattened conv weights (same block every grid step)
    # p_ref: (K_pad, TM)        bf16 transposed im2col patches (lane dim = M tile)
    # o_ref: (Cout_pad, TM)     f32 transposed conv output (lane dim = M tile, unmasked stores)
    o_ref[...] = jnp.dot(
        w_ref[...], p_ref[...], preferred_element_type=jnp.float32
    ).astype(o_ref.dtype)


def conv2d_pallas(x_nchw, w_t, *, cout, khw, stride, padding):
    """Conv2d (no bias) matching torch.nn.Conv2d semantics; GEMM done in Pallas.

    x_nchw : (N, Cin, H, W) float input.
    w_t    : (Cout_pad, K_pad) bf16 weights, K index = (kh*KW + kw)*Cin + c, zero-padded
             from K = KH*KW*Cin up to K_pad and from Cout up to Cout_pad.
    """
    N, Cin, H, W = x_nchw.shape
    KH, KW = khw
    sh, sw = stride
    ph, pw = padding
    Cout_pad, K_pad = w_t.shape
    K = KH * KW * Cin
    OH = (H + 2 * ph - KH) // sh + 1
    OW = (W + 2 * pw - KW) // sw + 1
    M = N * OH * OW

    TM = _choose_m_tile(M)
    M_pad = _round_up(M, TM)

    # --- glue (fused by jit around the pallas_call): build the TRANSPOSED im2col ---
    # Channel-first + spatial zero-pad; bf16 operands, f32 MXU accumulate in the kernel.
    x_cf = jnp.transpose(x_nchw, (1, 0, 2, 3)).astype(jnp.bfloat16)   # (Cin, N, H, W)
    xp = jnp.pad(x_cf, ((0, 0), (0, 0), (ph, ph), (pw, pw)))
    taps = []
    for kh in range(KH):
        for kw in range(KW):
            taps.append(
                lax.slice(
                    xp,
                    (0, 0, kh, kw),
                    (Cin, N, kh + sh * (OH - 1) + 1, kw + sw * (OW - 1) + 1),
                    (1, 1, sh, sw),
                )
            )  # each: (Cin, N, OH, OW)
    # K index = (kh*KW + kw)*Cin + c (matches w_t); M index = n*OH*OW + oh*OW + ow.
    p_t = jnp.stack(taps, axis=0).reshape(K, M)
    p_t = jnp.pad(p_t, ((0, K_pad - K), (0, M_pad - M)))              # (K_pad, M_pad)
    # TODO(synk): eliminating this HBM-materialized im2col (the review's remaining big item)
    # needs in-kernel strided tap gathers — stride-2 windows are not expressible by BlockSpec
    # index_maps — so it is kept in the jit-fused wrapper for robust Mosaic lowering.

    cost = pl.CostEstimate(
        flops=2 * M_pad * K_pad * Cout_pad,
        transcendentals=0,
        bytes_accessed=(
            K_pad * M_pad * 2          # bf16 patch reads
            + Cout_pad * K_pad * 2     # bf16 weight reads (resident, counted once)
            + Cout_pad * M_pad * 4     # f32 output writes
        ),
    )

    out_t = pl.pallas_call(
        _conv_gemm_kernel,
        out_shape=jax.ShapeDtypeStruct((Cout_pad, M_pad), jnp.float32),
        grid=(M_pad // TM,),
        in_specs=[
            pl.BlockSpec((Cout_pad, K_pad), lambda i: (0, 0)),   # weights, replicated
            pl.BlockSpec((K_pad, TM), lambda i: (0, i)),         # patches, lane-dense
        ],
        out_specs=pl.BlockSpec((Cout_pad, TM), lambda i: (0, i)),  # full-sublane, lane-dense stores
        compiler_params=pltpu.CompilerParams(
            dimension_semantics=("parallel",),     # shards M tiles across v7x's 2 TCs
            vmem_limit_bytes=32 * 1024 * 1024,     # above v5e's 16 MiB default, within v7x's 64 MiB
        ),
        cost_estimate=cost,
    )(w_t, p_t)

    # Drop Cout/M zero-padding; (Cout, M) -> (N, Cout, OH, OW) to match PyTorch's NCHW output.
    return out_t[:cout, :M].reshape(cout, N, OH, OW).transpose(1, 0, 2, 3)


class SimpleNetPallas:
    """JAX/Pallas port of SimpleNet. Only self.conv participates in forward();
    conv2/conv3/relu are unused by the PyTorch forward and therefore omitted."""

    def __init__(self, key):
        k_conv, _ = jax.random.split(key)
        cout, cin, kh, kw = 9, 3, 3, 3
        fan_in = cin * kh * kw
        bound = 1.0 / jnp.sqrt(fan_in)
        # Conv2d(3, 9, (3,3), stride=(2,2), padding=(1,1), bias=False) weights (OIHW, f32).
        self.conv_w = jax.random.uniform(
            k_conv, (cout, cin, kh, kw), dtype=jnp.float32, minval=-bound, maxval=bound
        )
        # One-time weight transform (hoisted out of the forward pass):
        # OIHW -> (Cout, K) with K index = (kh*KW + kw)*Cin + c, then zero-pad
        # K 27 -> 32 (sublane multiple) and Cout 9 -> 16 (unmasked output stores), bf16.
        k = kh * kw * cin
        k_pad = _round_up(k, 16)
        cout_pad = _round_up(cout, 16)
        w_flat = jnp.transpose(self.conv_w, (0, 2, 3, 1)).reshape(cout, k)
        self.w_t = jnp.pad(
            w_flat, ((0, cout_pad - cout), (0, k_pad - k))
        ).astype(jnp.bfloat16)
        # jit so the im2col / transpose glue fuses with the pallas_call into one program.
        self._forward = jax.jit(
            functools.partial(
                conv2d_pallas, cout=cout, khw=(kh, kw), stride=(2, 2), padding=(1, 1)
            )
        )

    def __call__(self, x_nchw):
        return self._forward(x_nchw, self.w_t)


if __name__ == "__main__":
    key = jax.random.PRNGKey(0)
    k_x, k_params = jax.random.split(key)

    # Small deterministic input consistent with Conv2d(3, ...): N=2, C=3, H=W=16.
    x = jax.random.normal(k_x, (2, 3, 16, 16), dtype=jnp.float32)

    net = SimpleNetPallas(k_params)
    y = jax.block_until_ready(net(x))
    assert y.shape == (2, 9, 8, 8), y.shape

    # Reference: XLA conv on the same bf16-rounded operands, exact f32 accumulation.
    x_ref = x.astype(jnp.bfloat16).astype(jnp.float32)
    w_ref = net.conv_w.astype(jnp.bfloat16).astype(jnp.float32)
    y_ref = lax.conv_general_dilated(
        x_ref,
        w_ref,
        window_strides=(2, 2),
        padding=((1, 1), (1, 1)),
        dimension_numbers=("NCHW", "OIHW", "NCHW"),
        precision=lax.Precision.HIGHEST,
    )
    assert jnp.allclose(y, y_ref, atol=1e-4, rtol=1e-4), float(
        jnp.max(jnp.abs(y - y_ref))
    )

    print("KERNEL_OK")
</pallas_src>

<mosaic_0001>
module attributes {stable_mosaic.version = 11 : i64} {
  func.func @_conv_gemm_kernel(%arg0: i32, %arg1: memref<16x32xbf16, #tpu.memory_space<vmem>>, %arg2: memref<32x128xbf16, #tpu.memory_space<vmem>>, %arg3: memref<16x128xf32, #tpu.memory_space<vmem>>) attributes {dimension_semantics = [#tpu.dimension_semantics<parallel>], iteration_bounds = array<i64: 1>, scalar_prefetch = 0 : i64, scratch_operands = 0 : i64, tpu.core_type = #tpu.core_type<tc>, window_params = [{pipeline_mode = #tpu.pipeline_mode<synchronous>, transform_indices = @transform_0, window_bounds = array<i64: 16, 32>}, {transform_indices = @transform_1, window_bounds = array<i64: 32, 128>}, {transform_indices = @transform_2, window_bounds = array<i64: 16, 128>}]} {
    %c0 = arith.constant 0 : index
    %c0_0 = arith.constant 0 : index
    %0 = vector.load %arg1[%c0, %c0_0] : memref<16x32xbf16, #tpu.memory_space<vmem>>, vector<16x32xbf16>
    %c0_1 = arith.constant 0 : index
    %c0_2 = arith.constant 0 : index
    %1 = vector.load %arg2[%c0_1, %c0_2] : memref<32x128xbf16, #tpu.memory_space<vmem>>, vector<32x128xbf16>
    %cst = arith.constant dense<0.000000e+00> : vector<16x128xf32>
    %2 = tpu.matmul %0, %1, %cst {dimension_numbers = #tpu.dot_dimension_numbers<[1], [0], [0], [1], [0, 0, 1, 1], [], []>} : vector<16x32xbf16>, vector<32x128xbf16>, vector<16x128xf32> -> vector<16x128xf32>
    %c0_3 = arith.constant 0 : index
    %c0_4 = arith.constant 0 : index
    %3 = vector.load %arg3[%c0_3, %c0_4] : memref<16x128xf32, #tpu.memory_space<vmem>>, vector<16x128xf32>
    tpu.vector_store %arg3[%c0_3, %c0_4], %2 {strides = array<i32>} : memref<16x128xf32, #tpu.memory_space<vmem>>, vector<16x128xf32>,
    return
  }
  func.func @transform_0(%arg0: i32) -> (i32, i32) {
    %c0_i32 = arith.constant 0 : i32
    %c0_i32_0 = arith.constant 0 : i32
    %c0_i32_1 = arith.constant 0 : i32
    return %c0_i32, %c0_i32_0 : i32, i32
  }
  func.func @transform_1(%arg0: i32) -> (i32, i32) {
    %c0_i32 = arith.constant 0 : i32
    %c0_i32_0 = arith.constant 0 : i32
    return %c0_i32, %arg0 : i32, i32
  }
  func.func @transform_2(%arg0: i32) -> (i32, i32) {
    %c0_i32 = arith.constant 0 : i32
    %c0_i32_0 = arith.constant 0 : i32
    return %c0_i32, %arg0 : i32, i32
  }
}

</mosaic_0001>

<llo_original>
// kernel: conv2d_pallas.1
$region0: #{conv2d_pallas.1}
  #allocation0 [shape = 'u32[]', space=smem, size = 0x4, offset = 0x4, fixed_abs, tag = 'smem constant byte address 0x4 - core index']
  #allocation1 [shape = 'u32[144,128]{1,0:T(1,128)}', space=vmem, size = 0x12000, scoped, tag = 'internal scratch']
  %s0 = inlined_call_operand.vmem [shape: bf16[16,32], index: 0, kind: input, shape index: {}]
  %s1 = inlined_call_operand.vmem [shape: bf16[32,128], index: 1, kind: input, shape index: {}]
  %s2 = inlined_call_operand.vmem [shape: f32[16,128], index: 2, kind: output, shape index: {}]
  %s3 = sld [smem:[#allocation0]]
  $region18: #{conv2d_pallas.1} parent=0
    _
  %s5 = ssub.s32 1, %s3
  %s6 = scalar_select 0, %s5, %s3
  // Predicated region
  $region2: #{conv2d_pallas.1} parent=0 // pred_check
    _
  $region3: #{conv2d_pallas.1} parent=0 // pred_check_branch
    %8 = sbr.rel (0) target = $region5
  $region4: #{conv2d_pallas.1} parent=0 // pred_region
    _
  $region5: #{conv2d_pallas.1} parent=0 // pred_fallthru
    _
  // Predicated region
  $region6: #{conv2d_pallas.1} parent=0 // pred_check
    _
  $region7: #{conv2d_pallas.1} parent=0 // pred_check_branch
    %10 = sbr.rel (0) target = $region9
  $region8: #{conv2d_pallas.1} parent=0 // pred_region
    _
  $region9: #{conv2d_pallas.1} parent=0 // pred_fallthru
    _
  %v12 = vld [vmem:[%s0] sm:$0xf]
  %v13 = vld [vmem:[%s0 + $0x4] sm:$0xf]
  %v14 = vld [vmem:[%s1] sm:$0xf]
  %v15 = vld [vmem:[%s1 + $0x4] sm:$0xf]
  %v16 = vld [vmem:[%s1 + $0x8] sm:$0xf]
  %v17 = vld [vmem:[%s1 + $0xc] sm:$0xf]
  %v20 = vunpack.c.l.b16 %v12
  %v21 = vunpack.c.l.b16 %v13
  %v22 = vpack.c.b16 %v21, %v20
  %v27 = vunpack.c.l.b16 %v14
  %v28 = vunpack.c.l.b16 %v15
  %v29 = vunpack.c.l.b16 %v16
  %v30 = vunpack.c.l.b16 %v17
  %v31 = vpack.c.b16 %v28, %v27
  %v32 = vpack.c.b16 %v30, %v29
  %vm35 = vcmask 261120
  %v37 = vsel %vm35, %v22, 0
  %39 = vmatprep.subr.bf16.mxu0 0
  %40 = vmatpush1.bf16.msra.mxu0 %v31
  %41 = vmatprep.subr.bf16.mxu0 0
  %42 = vmatpush1.bf16.msra.mxu0 %v32
  %43 = vmatprep.subr.bf16.mxu0 0
  %44 = vmatpush1.bf16.msra.mxu0 0
  %45 = vmatprep.subr.bf16.mxu0 0
  %46 = vmatpush1.bf16.msra.mxu0 0
  %47 = vmatprep.subr.bf16.mxu0 0
  %48 = vmatpush1.bf16.msra.mxu0 0
  %49 = vmatprep.subr.bf16.mxu0 0
  %50 = vmatpush1.bf16.msra.mxu0 0
  %51 = vmatprep.subr.bf16.mxu0 0
  %52 = vmatpush1.bf16.msra.mxu0 0
  %53 = vmatprep.subr.bf16.mxu0 0
  %54 = vmatpush1.bf16.msra.mxu0 0
  %55 = vmatprep.subr.bf16.mxu0 0
  %56 = vmatpush1.bf16.msra.mxu0 0
  %57 = vmatprep.subr.bf16.mxu0 0
  %58 = vmatpush1.bf16.msra.mxu0 0
  %59 = vmatprep.subr.bf16.mxu0 0
  %60 = vmatpush1.bf16.msra.mxu0 0
  %61 = vmatprep.subr.bf16.mxu0 0
  %62 = vmatpush1.bf16.msra.mxu0 0
  %63 = vmatprep.subr.bf16.mxu0 0
  %64 = vmatpush1.bf16.msra.mxu0 0
  %65 = vmatprep.subr.bf16.mxu0 0
  %66 = vmatpush1.bf16.msra.mxu0 0
  %67 = vmatprep.subr.bf16.mxu0 0
  %68 = vmatpush1.bf16.msra.mxu0 0
  %69 = vmatprep.subr.bf16.mxu0 0
  %70 = vmatpush1.bf16.msra.mxu0 0
  %71 = vmatprep.mubr.bf16.mxu0 0
  %72 = vmatmul.mubr.bf16.gmra.mrb[0].mxu0 %v37
  %v73 = vpop.f32.mrb[0].mxu0
  %v74 = vadd.f32 0.0, %v73
  %v75 = vpop.f32.mrb[0].mxu0
  %v76 = vpop.f32.mrb[0].mxu0
  %v77 = vadd.f32 0.0, %v76
  %v78 = vpop.f32.mrb[0].mxu0
  %79 = vdwg.mxu0
  %80 = vst [vmem:[%s2] sm:$0xff] %v74
  %81 = vst [vmem:[%s2 + $0x8] sm:$0xff] %v77
  // Predicated region
  $region10: #{conv2d_pallas.1} parent=0 // pred_check
    _
  $region11: #{conv2d_pallas.1} parent=0 // pred_check_branch
    %83 = sbr.rel (0) target = $region13
  $region12: #{conv2d_pallas.1} parent=0 // pred_region
    _
  $region13: #{conv2d_pallas.1} parent=0 // pred_fallthru
    _
  // Predicated region
  $region14: #{conv2d_pallas.1} parent=0 // pred_check
    _
  $region15: #{conv2d_pallas.1} parent=0 // pred_check_branch
    %85 = sbr.rel (0) target = $region17
  $region16: #{conv2d_pallas.1} parent=0 // pred_region
    _
  $region17: #{conv2d_pallas.1} parent=0 // pred_fallthru
    _

</llo_original>
